<compile_context>
chip_gen: v6e
topology: v6e:2x2x1
jax: 0.10.0
libtpu: 0.0.40
codegen_flags: <defaults>
</compile_context>

<pallas_src>
import functools

import jax
import jax.numpy as jnp
from jax import lax
from jax.experimental import pallas as pl
from jax.experimental.pallas import tpu as pltpu


def _round_up(x, m):
    return (x + m - 1) // m * m


def attn_kernel(dec_ref, enc_ref, phi_w_ref, phi_b_ref, psi_w_ref, psi_b_ref,
                attn_ref, ctx_ref, *, enc_len):
    # dec_ref : [TB, F]      decoder rows for this grid block (batch-padded)
    # enc_ref : [TB*LS, F]   encoder rows, flattened; LS = round_up(L, 8)
    # attn_ref: [TB, LS]     per-row attention weights (block-diagonal fold)
    # ctx_ref : [TB, F]      attention-weighted context
    TB, LS = attn_ref.shape
    dec = dec_ref[...]
    enc = enc_ref[...]

    # comp_decoder_state = ReLU(phi(decoder_state))     -> [TB, M]
    d = jnp.dot(dec, phi_w_ref[...], preferred_element_type=jnp.float32)
    d = jnp.maximum(d + phi_b_ref[...], 0.0)

    # comp_encoder_feature = ReLU(psi(encoder_feature)) -> [TB*LS, M]
    e = jnp.dot(enc, psi_w_ref[...], preferred_element_type=jnp.float32)
    e = jnp.maximum(e + psi_b_ref[...], 0.0)

    # Dense cross-energy [TB, TB*LS] via an NT matmul (contract the last dim
    # of both operands).  The large operand `e` keeps its natural layout; at
    # [TB*LS, M] = [64, 256] any compiler-inserted relayout is a handful of
    # XLU ops.  (At production sizes, keep the big operand in weight layout /
    # switch to the flash-style L grid axis — see TODO above.)
    energy = lax.dot_general(
        d, e, dimension_numbers=(((1,), (1,)), ((), ())),
        preferred_element_type=jnp.float32)

    # Row r owns lanes [r*LS, r*LS + enc_len); everything else (cross-batch
    # lanes + the L->LS sublane padding) is masked.  The mask is re-applied
    # after exp, so off-block lanes are *exactly* zero by construction.
    rows = lax.broadcasted_iota(jnp.int32, energy.shape, 0)
    lanes = lax.broadcasted_iota(jnp.int32, energy.shape, 1)
    off = lanes - rows * LS
    valid = (off >= 0) & (off < enc_len)
    masked = jnp.where(valid, energy, jnp.float32(-1e30))

    m = jnp.max(masked, axis=-1, keepdims=True)
    p = jnp.where(valid, jnp.exp(masked - m), 0.0)      # exact 0 off-block
    denom = jnp.sum(p, axis=-1, keepdims=True)          # >= 1, never 0
    attn = p / denom                                    # exact reciprocal

    # context[r] = sum_l attn[r, l] * enc[l, :]; off-block lanes are exactly 0
    # so the dense matmul is exact.
    ctx = jnp.dot(attn, enc, preferred_element_type=jnp.float32)   # [TB, F]
    ctx_ref[...] = ctx.astype(ctx_ref.dtype)

    # In-kernel block-diagonal fold: sum the TB static LS-wide lane slices
    # (plain adds; off-block entries are exact zeros), so only [TB, LS] is
    # written back to HBM instead of [TB, TB*LS] plus a separate XLA reduce.
    blk = attn[:, 0:LS]
    for r in range(1, TB):
        blk = blk + attn[:, r * LS:(r + 1) * LS]
    attn_ref[...] = blk.astype(attn_ref.dtype)


def attn_layer(decoder_state, encoder_feature, phi_w, phi_b, psi_w, psi_b):
    B, one, F = decoder_state.shape
    assert one == 1
    _, L, F2 = encoder_feature.shape
    assert F2 == F
    M = phi_w.shape[1]

    SUB = 8
    TB = SUB                        # batch rows per grid step (fixed)
    BP = _round_up(B, TB)           # batch padded to a sublane multiple
    LS = _round_up(L, SUB)          # encoder length padded to a sublane multiple
    nb = BP // TB                   # grid steps; >= 2 once B >= 16 (v7x 2-TC)

    f32 = jnp.float32
    # Wrapper-side layout plumbing only — no lane padding, so no 4-64x zero
    # padding is shipped through HBM (F and L stay at their natural sizes).
    dec_p = jnp.pad(decoder_state[:, 0, :].astype(f32), ((0, BP - B), (0, 0)))
    enc_p = jnp.pad(encoder_feature.astype(f32),
                    ((0, BP - B), (0, LS - L), (0, 0)))
    enc_flat = enc_p.reshape(BP * LS, F)        # trivial row-major reshape
    phi_w_p = phi_w.astype(f32)
    psi_w_p = psi_w.astype(f32)
    phi_b_p = phi_b.reshape(1, M).astype(f32)
    psi_b_p = psi_b.reshape(1, M).astype(f32)

    kernel = functools.partial(attn_kernel, enc_len=L)

    grid_spec = pltpu.PrefetchScalarGridSpec(
        num_scalar_prefetch=0,
        grid=(nb,),
        in_specs=[
            pl.BlockSpec((TB, F), lambda b: (b, 0)),        # decoder rows
            pl.BlockSpec((TB * LS, F), lambda b: (b, 0)),   # encoder slab
            pl.BlockSpec((F, M), lambda b: (0, 0)),         # phi_w
            pl.BlockSpec((1, M), lambda b: (0, 0)),         # phi_b
            pl.BlockSpec((F, M), lambda b: (0, 0)),         # psi_w
            pl.BlockSpec((1, M), lambda b: (0, 0)),         # psi_b
        ],
        out_specs=[
            pl.BlockSpec((TB, LS), lambda b: (b, 0)),       # attn weights
            pl.BlockSpec((TB, F), lambda b: (b, 0)),        # context
        ],
    )

    attn_full, ctx_full = pl.pallas_call(
        kernel,
        out_shape=(
            jax.ShapeDtypeStruct((BP, LS), f32),
            jax.ShapeDtypeStruct((BP, F), f32),
        ),
        grid_spec=grid_spec,
        compiler_params=pltpu.CompilerParams(
            dimension_semantics=("parallel",),
            vmem_limit_bytes=32 * 1024 * 1024),
    )(dec_p, enc_flat, phi_w_p, phi_b_p, psi_w_p, psi_b_p)

    # Drop batch and encoder-length padding.
    return attn_full[:B, :L], ctx_full[:B, :F]


def reference(decoder_state, encoder_feature, phi_w, phi_b, psi_w, psi_b):
    # Pure-JAX reference mirroring the PyTorch forward.
    d = jax.nn.relu(decoder_state @ phi_w + phi_b)            # [B,1,M]
    e = jax.nn.relu(encoder_feature @ psi_w + psi_b)          # [B,L,M]
    energy = jnp.einsum("bim,blm->bil", d, e)[:, 0, :]        # [B,L]
    attn = jax.nn.softmax(energy, axis=-1)                    # [B,L]
    ctx = jnp.einsum("bl,blf->bf", attn, encoder_feature)     # [B,F]
    return attn, ctx


if __name__ == "__main__":
    B, L, F = 2, 8, 32        # batch, enc_len, enc_feat_dim (== dec_hidden_dim)
    M = 256                   # preprocess_mlp_dim (fixed in the module)

    key = jax.random.PRNGKey(0)
    k1, k2, k3, k4, k5, k6 = jax.random.split(key, 6)

    decoder_state = jax.random.normal(k1, (B, 1, F), dtype=jnp.float32)
    encoder_feature = jax.random.normal(k2, (B, L, F), dtype=jnp.float32)

    # Deterministic synthetic parameters (Linear stored as y = x @ W + b).
    scale = 1.0 / jnp.sqrt(jnp.float32(F))
    phi_w = jax.random.normal(k3, (F, M), dtype=jnp.float32) * scale
    phi_b = jax.random.normal(k4, (1, M), dtype=jnp.float32) * 0.01
    psi_w = jax.random.normal(k5, (F, M), dtype=jnp.float32) * scale
    psi_b = jax.random.normal(k6, (1, M), dtype=jnp.float32) * 0.01

    attn, ctx = attn_layer(decoder_state, encoder_feature,
                           phi_w, phi_b, psi_w, psi_b)
    jax.block_until_ready((attn, ctx))

    attn_ref, ctx_ref = reference(decoder_state, encoder_feature,
                                  phi_w, phi_b, psi_w, psi_b)
    assert attn.shape == (B, L) and ctx.shape == (B, F)
    # Exact reciprocal: rows sum to 1 to f32 precision.
    assert jnp.allclose(jnp.sum(attn, axis=-1), 1.0, atol=1e-5)
    # Tolerance tightened vs. the previous (approx-reciprocal) version; the
    # residual slack absorbs XLA-vs-Mosaic f32 MXU accumulation differences.
    assert jnp.allclose(attn, attn_ref, atol=1e-3, rtol=1e-2), \
        float(jnp.max(jnp.abs(attn - attn_ref)))
    assert jnp.allclose(ctx, ctx_ref, atol=1e-3, rtol=1e-2), \
        float(jnp.max(jnp.abs(ctx - ctx_ref)))

    # TODO(synk): original module leaves encoder padding masking as a TODO; the
    # in-kernel lane mask already supports it if real lengths are plumbed in.
    print("KERNEL_OK")
</pallas_src>

<mosaic_0001>
module attributes {stable_mosaic.version = 11 : i64} {
  func.func @attn_kernel(%arg0: i32, %arg1: memref<8x32xf32, #tpu.memory_space<vmem>>, %arg2: memref<64x32xf32, #tpu.memory_space<vmem>>, %arg3: memref<32x256xf32, #tpu.memory_space<vmem>>, %arg4: memref<1x256xf32, #tpu.memory_space<vmem>>, %arg5: memref<32x256xf32, #tpu.memory_space<vmem>>, %arg6: memref<1x256xf32, #tpu.memory_space<vmem>>, %arg7: memref<8x8xf32, #tpu.memory_space<vmem>>, %arg8: memref<8x32xf32, #tpu.memory_space<vmem>>) attributes {dimension_semantics = [#tpu.dimension_semantics<parallel>], iteration_bounds = array<i64: 1>, scalar_prefetch = 0 : i64, scratch_operands = 0 : i64, tpu.core_type = #tpu.core_type<tc>, window_params = [{transform_indices = @transform_0, window_bounds = array<i64: 8, 32>}, {transform_indices = @transform_1, window_bounds = array<i64: 64, 32>}, {pipeline_mode = #tpu.pipeline_mode<synchronous>, transform_indices = @transform_2, window_bounds = array<i64: 32, 256>}, {pipeline_mode = #tpu.pipeline_mode<synchronous>, transform_indices = @transform_3, window_bounds = array<i64: 1, 256>}, {pipeline_mode = #tpu.pipeline_mode<synchronous>, transform_indices = @transform_4, window_bounds = array<i64: 32, 256>}, {pipeline_mode = #tpu.pipeline_mode<synchronous>, transform_indices = @transform_5, window_bounds = array<i64: 1, 256>}, {transform_indices = @transform_6, window_bounds = array<i64: 8, 8>}, {transform_indices = @transform_7, window_bounds = array<i64: 8, 32>}]} {
    %c0 = arith.constant 0 : index
    %c0_0 = arith.constant 0 : index
    %0 = vector.load %arg1[%c0, %c0_0] : memref<8x32xf32, #tpu.memory_space<vmem>>, vector<8x32xf32>
    %c0_1 = arith.constant 0 : index
    %c0_2 = arith.constant 0 : index
    %1 = vector.load %arg2[%c0_1, %c0_2] : memref<64x32xf32, #tpu.memory_space<vmem>>, vector<64x32xf32>
    %c0_3 = arith.constant 0 : index
    %c0_4 = arith.constant 0 : index
    %2 = vector.load %arg3[%c0_3, %c0_4] : memref<32x256xf32, #tpu.memory_space<vmem>>, vector<32x256xf32>
    %cst = arith.constant dense<0.000000e+00> : vector<8x256xf32>
    %3 = tpu.matmul %0, %2, %cst {dimension_numbers = #tpu.dot_dimension_numbers<[1], [0], [0], [1], [0, 0, 1, 1], [], []>} : vector<8x32xf32>, vector<32x256xf32>, vector<8x256xf32> -> vector<8x256xf32>
    %c0_5 = arith.constant 0 : index
    %c0_6 = arith.constant 0 : index
    %4 = vector.load %arg4[%c0_5, %c0_6] : memref<1x256xf32, #tpu.memory_space<vmem>>, vector<1x256xf32>
    %5 = vector.broadcast %4 : vector<1x256xf32> to vector<8x256xf32>
    %6 = arith.addf %3, %5 : vector<8x256xf32>
    %cst_7 = arith.constant 0.000000e+00 : f32
    %7 = vector.broadcast %cst_7 : f32 to vector<8x256xf32>
    %8 = arith.maximumf %6, %7 : vector<8x256xf32>
    %c0_8 = arith.constant 0 : index
    %c0_9 = arith.constant 0 : index
    %9 = vector.load %arg5[%c0_8, %c0_9] : memref<32x256xf32, #tpu.memory_space<vmem>>, vector<32x256xf32>
    %cst_10 = arith.constant dense<0.000000e+00> : vector<64x256xf32>
    %10 = tpu.matmul %1, %9, %cst_10 {dimension_numbers = #tpu.dot_dimension_numbers<[1], [0], [0], [1], [0, 0, 1, 1], [], []>} : vector<64x32xf32>, vector<32x256xf32>, vector<64x256xf32> -> vector<64x256xf32>
    %c0_11 = arith.constant 0 : index
    %c0_12 = arith.constant 0 : index
    %11 = vector.load %arg6[%c0_11, %c0_12] : memref<1x256xf32, #tpu.memory_space<vmem>>, vector<1x256xf32>
    %12 = vector.broadcast %11 : vector<1x256xf32> to vector<64x256xf32>
    %13 = arith.addf %10, %12 : vector<64x256xf32>
    %cst_13 = arith.constant 0.000000e+00 : f32
    %14 = vector.broadcast %cst_13 : f32 to vector<64x256xf32>
    %15 = arith.maximumf %13, %14 : vector<64x256xf32>
    %cst_14 = arith.constant dense<0.000000e+00> : vector<8x64xf32>
    %16 = tpu.matmul %8, %15, %cst_14 {dimension_numbers = #tpu.dot_dimension_numbers<[1], [1], [0], [0], [0, 0, 1, 0], [], []>} : vector<8x256xf32>, vector<64x256xf32>, vector<8x64xf32> -> vector<8x64xf32>
    %17 = tpu.iota {dimensions = array<i32: 0>} : vector<8x64xi32>
    %18 = tpu.iota {dimensions = array<i32: 1>} : vector<8x64xi32>
    %c8_i32 = arith.constant 8 : i32
    %19 = vector.broadcast %c8_i32 : i32 to vector<8x64xi32>
    %20 = arith.muli %17, %19 : vector<8x64xi32>
    %21 = arith.subi %18, %20 : vector<8x64xi32>
    %c0_i32 = arith.constant 0 : i32
    %22 = vector.broadcast %c0_i32 : i32 to vector<8x64xi32>
    %23 = arith.cmpi sge, %21, %22 : vector<8x64xi32>
    %c8_i32_15 = arith.constant 8 : i32
    %24 = vector.broadcast %c8_i32_15 : i32 to vector<8x64xi32>
    %25 = arith.cmpi slt, %21, %24 : vector<8x64xi32>
    %26 = arith.andi %23, %25 : vector<8x64xi1>
    %cst_16 = arith.constant -1.000000e+30 : f32
    %27 = vector.broadcast %cst_16 : f32 to vector<8x64xf32>
    %28 = arith.select %26, %16, %27 : vector<8x64xi1>, vector<8x64xf32>
    %cst_17 = arith.constant dense<0xFF800000> : vector<8xf32>
    %29 = vector.multi_reduction <maximumf>, %28, %cst_17 [1] : vector<8x64xf32> to vector<8xf32>
    %30 = vector.shape_cast %29 : vector<8xf32> to vector<8x1xf32>
    %31 = vector.broadcast %30 : vector<8x1xf32> to vector<8x64xf32>
    %32 = arith.subf %28, %31 : vector<8x64xf32>
    %33 = math.exp %32 : vector<8x64xf32>
    %cst_18 = arith.constant 0.000000e+00 : f32
    %34 = vector.broadcast %cst_18 : f32 to vector<8x64xf32>
    %35 = arith.select %26, %33, %34 : vector<8x64xi1>, vector<8x64xf32>
    %cst_19 = arith.constant dense<0.000000e+00> : vector<8xf32>
    %36 = vector.multi_reduction <add>, %35, %cst_19 [1] : vector<8x64xf32> to vector<8xf32>
    %37 = vector.shape_cast %36 : vector<8xf32> to vector<8x1xf32>
    %38 = vector.broadcast %37 : vector<8x1xf32> to vector<8x64xf32>
    %39 = arith.divf %35, %38 : vector<8x64xf32>
    %cst_20 = arith.constant dense<0.000000e+00> : vector<8x32xf32>
    %40 = tpu.matmul %39, %1, %cst_20 {dimension_numbers = #tpu.dot_dimension_numbers<[1], [0], [0], [1], [0, 0, 1, 1], [], []>} : vector<8x64xf32>, vector<64x32xf32>, vector<8x32xf32> -> vector<8x32xf32>
    %c0_21 = arith.constant 0 : index
    %c0_22 = arith.constant 0 : index
    %41 = vector.load %arg8[%c0_21, %c0_22] : memref<8x32xf32, #tpu.memory_space<vmem>>, vector<8x32xf32>
    tpu.vector_store %arg8[%c0_21, %c0_22], %40 {strides = array<i32>} : memref<8x32xf32, #tpu.memory_space<vmem>>, vector<8x32xf32>,
    %42 = vector.extract_strided_slice %39 {offsets = [0, 0], sizes = [8, 8], strides = [1, 1]} : vector<8x64xf32> to vector<8x8xf32>
    %43 = vector.extract_strided_slice %39 {offsets = [0, 8], sizes = [8, 8], strides = [1, 1]} : vector<8x64xf32> to vector<8x8xf32>
    %44 = arith.addf %42, %43 : vector<8x8xf32>
    %45 = vector.extract_strided_slice %39 {offsets = [0, 16], sizes = [8, 8], strides = [1, 1]} : vector<8x64xf32> to vector<8x8xf32>
    %46 = arith.addf %44, %45 : vector<8x8xf32>
    %47 = vector.extract_strided_slice %39 {offsets = [0, 24], sizes = [8, 8], strides = [1, 1]} : vector<8x64xf32> to vector<8x8xf32>
    %48 = arith.addf %46, %47 : vector<8x8xf32>
    %49 = vector.extract_strided_slice %39 {offsets = [0, 32], sizes = [8, 8], strides = [1, 1]} : vector<8x64xf32> to vector<8x8xf32>
    %50 = arith.addf %48, %49 : vector<8x8xf32>
    %51 = vector.extract_strided_slice %39 {offsets = [0, 40], sizes = [8, 8], strides = [1, 1]} : vector<8x64xf32> to vector<8x8xf32>
    %52 = arith.addf %50, %51 : vector<8x8xf32>
    %53 = vector.extract_strided_slice %39 {offsets = [0, 48], sizes = [8, 8], strides = [1, 1]} : vector<8x64xf32> to vector<8x8xf32>
    %54 = arith.addf %52, %53 : vector<8x8xf32>
    %55 = vector.extract_strided_slice %39 {offsets = [0, 56], sizes = [8, 8], strides = [1, 1]} : vector<8x64xf32> to vector<8x8xf32>
    %56 = arith.addf %54, %55 : vector<8x8xf32>
    %c0_23 = arith.constant 0 : index
    %c0_24 = arith.constant 0 : index
    %57 = vector.load %arg7[%c0_23, %c0_24] : memref<8x8xf32, #tpu.memory_space<vmem>>, vector<8x8xf32>
    tpu.vector_store %arg7[%c0_23, %c0_24], %56 {strides = array<i32>} : memref<8x8xf32, #tpu.memory_space<vmem>>, vector<8x8xf32>,
    return
  }
  func.func @transform_0(%arg0: i32) -> (i32, i32) {
    %c0_i32 = arith.constant 0 : i32
    %c0_i32_0 = arith.constant 0 : i32
    return %arg0, %c0_i32 : i32, i32
  }
  func.func @transform_1(%arg0: i32) -> (i32, i32) {
    %c0_i32 = arith.constant 0 : i32
    %c0_i32_0 = arith.constant 0 : i32
    return %arg0, %c0_i32 : i32, i32
  }
  func.func @transform_2(%arg0: i32) -> (i32, i32) {
    %c0_i32 = arith.constant 0 : i32
    %c0_i32_0 = arith.constant 0 : i32
    %c0_i32_1 = arith.constant 0 : i32
    return %c0_i32, %c0_i32_0 : i32, i32
  }
  func.func @transform_3(%arg0: i32) -> (i32, i32) {
    %c0_i32 = arith.constant 0 : i32
    %c0_i32_0 = arith.constant 0 : i32
    %c0_i32_1 = arith.constant 0 : i32
    return %c0_i32, %c0_i32_0 : i32, i32
  }
  func.func @transform_4(%arg0: i32) -> (i32, i32) {
    %c0_i32 = arith.constant 0 : i32
    %c0_i32_0 = arith.constant 0 : i32
    %c0_i32_1 = arith.constant 0 : i32
    return %c0_i32, %c0_i32_0 : i32, i32
  }
  func.func @transform_5(%arg0: i32) -> (i32, i32) {
    %c0_i32 = arith.constant 0 : i32
    %c0_i32_0 = arith.constant 0 : i32
    %c0_i32_1 = arith.constant 0 : i32
    return %c0_i32, %c0_i32_0 : i32, i32
  }
  func.func @transform_6(%arg0: i32) -> (i32, i32) {
    %c0_i32 = arith.constant 0 : i32
    %c0_i32_0 = arith.constant 0 : i32
    return %arg0, %c0_i32 : i32, i32
  }
  func.func @transform_7(%arg0: i32) -> (i32, i32) {
    %c0_i32 = arith.constant 0 : i32
    %c0_i32_0 = arith.constant 0 : i32
    return %arg0, %c0_i32 : i32, i32
  }
}

</mosaic_0001>

<llo_original>
// kernel: tpu_custom_call.1
$region0: #{tpu_custom_call.1}
  #allocation0 [shape = 'u32[]', space=smem, size = 0x4, offset = 0x4, fixed_abs, tag = 'smem constant byte address 0x4 - core index']
  #allocation1 [shape = 'u32[144,128]{1,0:T(1,128)}', space=vmem, size = 0x12000, scoped, tag = 'internal scratch']
  %s0 = inlined_call_operand.vmem [shape: f32[8,32], index: 0, kind: input, shape index: {}]
  %s1 = inlined_call_operand.vmem [shape: f32[64,32], index: 1, kind: input, shape index: {}]
  %s2 = inlined_call_operand.vmem [shape: f32[32,256], index: 2, kind: input, shape index: {}]
  %s3 = inlined_call_operand.vmem [shape: f32[1,256], index: 3, kind: input, shape index: {}]
  %s4 = inlined_call_operand.hbm [shape: f32[32,256], index: 4, kind: input, shape index: {}]
  %s5 = inlined_call_operand.vmem [shape: f32[1,256], index: 5, kind: input, shape index: {}]
  %s6 = inlined_call_operand.hbm [shape: f32[8,8], index: 6, kind: output, shape index: {0}]
  %s7 = inlined_call_operand.hbm [shape: f32[8,32], index: 7, kind: output, shape index: {1}]
  %8 = xla_tuple %s6, %s7
  %s9 = sld [smem:[#allocation0]]
  $region46: #{tpu_custom_call.1} parent=0
    _
  %s11 = ssub.s32 1, %s9
  %s12 = scalar_select 0, %s11, %s9
  $region1: #{tpu_custom_call.1} parent=0
    #allocation2 [shape = 'u8[32768]{0}', space=vmem, size = 0x8000, scoped, tag = 'input window, operand 4, single buffered']
    #allocation3 [shape = 's32[1]{0}', space=sflag, size = 0x4, scoped, tag = 'scoped memory for tpu_custom_call.1']
    #allocation4 [shape = 's32[1]{0}', space=sflag, size = 0x4, scoped, tag = 'scoped memory for tpu_custom_call.1']
    #allocation5 [shape = 'u8[4096]{0}', space=vmem, size = 0x1000, scoped, tag = 'output window, operand 0, single buffered']
    #allocation6 [shape = 'u8[4096]{0}', space=vmem, size = 0x1000, scoped, tag = 'output window, operand 1, single buffered']
    #allocation7 [shape = 's32[1]{0}', space=sflag, size = 0x4, scoped, tag = 'scoped memory for tpu_custom_call.1']
    %13 = vsyncpa [#allocation3], 0
    %14 = vsyncpa [#allocation4], 0
    %15 = vsyncpa [#allocation7], 0
    // Predicated region
    $region2: #{tpu_custom_call.1} parent=1 // pred_check
      _
    $region3: #{tpu_custom_call.1} parent=1 // pred_check_branch
      %17 = sbr.rel (0) target = $region5
    $region4: #{tpu_custom_call.1} parent=1 // pred_region
      _
    $region5: #{tpu_custom_call.1} parent=1 // pred_fallthru
      _
    // Predicated region
    $region6: #{tpu_custom_call.1} parent=1 // pred_check
      _
    $region7: #{tpu_custom_call.1} parent=1 // pred_check_branch
      %19 = sbr.rel (0) target = $region9
    $region8: #{tpu_custom_call.1} parent=1 // pred_region
      _
    $region9: #{tpu_custom_call.1} parent=1 // pred_fallthru
      _
    // Predicated region
    $region10: #{tpu_custom_call.1} parent=1 // pred_check
      _
    $region11: #{tpu_custom_call.1} parent=1 // pred_check_branch
      %21 = sbr.rel (0) target = $region13
    $region12: #{tpu_custom_call.1} parent=1 // pred_region
      _
    $region13: #{tpu_custom_call.1} parent=1 // pred_fallthru
      _
    // Predicated region
    $region14: #{tpu_custom_call.1} parent=1 // pred_check
      _
    $region15: #{tpu_custom_call.1} parent=1 // pred_check_branch
      %23 = sbr.rel (0) target = $region17
    $region16: #{tpu_custom_call.1} parent=1 // pred_region
      _
    $region17: #{tpu_custom_call.1} parent=1 // pred_fallthru
      _
    // Predicated region
    $region18: #{tpu_custom_call.1} parent=1 // pred_check
      _
    $region19: #{tpu_custom_call.1} parent=1 // pred_check_branch
      %25 = sbr.rel (0) target = $region21
    $region20: #{tpu_custom_call.1} parent=1 // pred_region
      %s27 = ssub.s32 1024, 1024
      %28 = vsyncadd [#allocation3], %s27
      %s29 = sshll.u32 [#allocation2], 4
      %s30 = int_to_ptr.vmem [resolvable:$true] %s29
      %35 = dma.hbm_to_vmem [thread:$0]  %s4, 1024, %s30, [#allocation3], 256, 256, 16
    $region21: #{tpu_custom_call.1} parent=1 // pred_fallthru
      _
    // Predicated region
    $region22: #{tpu_custom_call.1} parent=1 // pred_check
      _
    $region23: #{tpu_custom_call.1} parent=1 // pred_check_branch
      %37 = sbr.rel (0) target = $region25
    $region24: #{tpu_custom_call.1} parent=1 // pred_region
      _
    $region25: #{tpu_custom_call.1} parent=1 // pred_fallthru
      _
    // Predicated region
    $region26: #{tpu_custom_call.1} parent=1 // pred_check
      _
    $region27: #{tpu_custom_call.1} parent=1 // pred_check_branch
      %39 = sbr.rel (0) target = $region29
    $region28: #{tpu_custom_call.1} parent=1 // pred_region
      %40 = dma.done [#allocation3], 1024
    $region29: #{tpu_custom_call.1} parent=1 // pred_fallthru
      _
    %v41 = vld [vmem:[%s0] sm:$0xff]
    %v42 = vld [vmem:[%s1] sm:$0xff]
    %v43 = vld [vmem:[%s1 + $0x8] sm:$0xff]
    %v44 = vld [vmem:[%s1 + $0x10] sm:$0xff]
    %v45 = vld [vmem:[%s1 + $0x18] sm:$0xff]
    %v46 = vld [vmem:[%s1 + $0x20] sm:$0xff]
    %v47 = vld [vmem:[%s1 + $0x28] sm:$0xff]
    %v48 = vld [vmem:[%s1 + $0x30] sm:$0xff]
    %v49 = vld [vmem:[%s1 + $0x38] sm:$0xff]
    %v50 = vld [vmem:[%s2] sm:$0xff]
    %v51 = vld [vmem:[%s2 + $0x8] sm:$0xff]
    %v52 = vld [vmem:[%s2 + $0x10] sm:$0xff]
    %v53 = vld [vmem:[%s2 + $0x18] sm:$0xff]
    %v54 = vld [vmem:[%s2 + $0x20] sm:$0xff]
    %v55 = vld [vmem:[%s2 + $0x28] sm:$0xff]
    %v56 = vld [vmem:[%s2 + $0x30] sm:$0xff]
    %v57 = vld [vmem:[%s2 + $0x38] sm:$0xff]
    %v58 = vld [vmem:[%s3] sm:$0x3]
    %v60 = vlaneseq
    %v61 = vshrl.u32 %v60, 7
    %v62 = vsub.s32 0, %v61
    %v63 = vrot.slane %v58, %v62
    %v64 = vlaneseq
    %v65 = vshrl.u32 %v64, 7
    %v66 = vsub.s32 1, %v65
    %v67 = vrot.slane %v58, %v66
    %vm70 = vcmask 261120
    %v72 = vsel %vm70, %v41, 0
    %74 = vmatprep.subr.mxu0 0.0
    %75 = vmatpush1.msra.mxu0 0.0
    %76 = vmatprep.subr.mxu0 0.0
    %77 = vmatpush1.msra.mxu0 0.0
    %78 = vmatprep.subr.mxu0 0.0
    %79 = vmatpush1.msra.mxu0 0.0
    %80 = vmatprep.subr.mxu0 0.0
    %81 = vmatpush1.msra.mxu0 0.0
    %82 = vmatprep.subr.mxu0 0.0
    %83 = vmatpush1.msra.mxu0 0.0
    %84 = vmatprep.subr.mxu0 0.0
    %85 = vmatpush1.msra.mxu0 0.0
    %86 = vmatprep.subr.mxu0 0.0
    %87 = vmatpush1.msra.mxu0 0.0
    %88 = vmatprep.subr.mxu0 0.0
    %89 = vmatpush1.msra.mxu0 0.0
    %90 = vmatprep.subr.mxu0 0.0
    %91 = vmatpush1.msra.mxu0 0.0
    %92 = vmatprep.subr.mxu0 0.0
    %93 = vmatpush1.msra.mxu0 0.0
    %94 = vmatprep.subr.mxu0 0.0
    %95 = vmatpush1.msra.mxu0 0.0
    %96 = vmatprep.subr.mxu0 0.0
    %97 = vmatpush1.msra.mxu0 0.0
    %98 = vmatprep.subr.mxu0 %v57
    %99 = vmatpush1.msra.mxu0 %v56
    %100 = vmatprep.subr.mxu0 %v55
    %101 = vmatpush1.msra.mxu0 %v54
    %102 = vmatprep.subr.mxu0 %v53
    %103 = vmatpush1.msra.mxu0 %v52
    %104 = vmatprep.subr.mxu0 %v51
    %105 = vmatpush1.msra.mxu0 %v50
    %106 = vmatprep.subr.mxu0 0.0
    %107 = vmatpush2.msra.mxu0 0.0
    %108 = vmatprep.subr.mxu0 0.0
    %109 = vmatpush2.msra.mxu0 0.0
    %110 = vmatprep.subr.mxu0 0.0
    %111 = vmatpush2.msra.mxu0 0.0
    %112 = vmatprep.subr.mxu0 0.0
    %113 = vmatpush2.msra.mxu0 0.0
    %114 = vmatprep.subr.mxu0 0.0
    %115 = vmatpush2.msra.mxu0 0.0
    %116 = vmatprep.subr.mxu0 0.0
    %117 = vmatpush2.msra.mxu0 0.0
    %118 = vmatprep.subr.mxu0 0.0
    %119 = vmatpush2.msra.mxu0 0.0
    %120 = vmatprep.subr.mxu0 0.0
    %121 = vmatpush2.msra.mxu0 0.0
    %122 = vmatprep.subr.mxu0 0.0
    %123 = vmatpush2.msra.mxu0 0.0
    %124 = vmatprep.subr.mxu0 0.0
    %125 = vmatpush2.msra.mxu0 0.0
    %126 = vmatprep.subr.mxu0 0.0
    %127 = vmatpush2.msra.mxu0 0.0
    %128 = vmatprep.subr.mxu0 0.0
    %129 = vmatpush2.msra.mxu0 0.0
    %130 = vmatprep.subr.mxu0 0.0
    %131 = vmatpush2.msra.mxu0 0.0
    %132 = vmatprep.subr.mxu0 0.0
    %133 = vmatpush2.msra.mxu0 0.0
    %134 = vmatprep.subr.mxu0 0.0
    %135 = vmatpush2.msra.mxu0 0.0
    %136 = vmatprep.subr.mxu0 0.0
    %137 = vmatpush2.msra.mxu0 0.0
    %138 = vmatprep.mubr.f32.mxu0 0.0
    %139 = vmatmul.mubr.f32.gmra.mxu0 %v72
    %v140 = vpop.f32.mrf.mxu0
    %v141 = vadd.f32 %v63, %v140
    %v142 = vpop.f32.mrf.mxu0
    %v143 = vadd.f32 %v67, %v142
    %144 = vdwg.mxu0
    %v145 = vmax.f32 %v141, 0.0
    %v146 = vmax.f32 %v143, 0.0
    %v147 = vld [vmem:[#allocation2] sm:$0xff]
    %v148 = vld [vmem:[#allocation2 + $0x8] sm:$0xff]
    %v149 = vld [vmem:[#allocation2 + $0x10] sm:$0xff]
    %v150 = vld [vmem:[#allocation2 + $0x18] sm:$0xff]
    %v151 = vld [vmem:[#allocation2 + $0x20] sm:$0xff]
    %v152 = vld [vmem:[#allocation2 + $0x28] sm:$0xff]
    %v153 = vld [vmem:[#allocation2 + $0x30] sm:$0xff]
    %v154 = vld [vmem:[#allocation2 + $0x38] sm:$0xff]
    %v155 = vld [vmem:[%s5] sm:$0x3]
    %v157 = vlaneseq
    %v158 = vshrl.u32 %v157, 7
    %v159 = vsub.s32 0, %v158
    %v160 = vrot.slane %v155, %v159
    %v161 = vlaneseq
    %v162 = vshrl.u32 %v161, 7
    %v163 = vsub.s32 1, %v162
    %v164 = vrot.slane %v155, %v163
    %v168 = vsel %vm70, %v42, 0
    %v171 = vsel %vm70, %v43, 0
    %v174 = vsel %vm70, %v44, 0
    %v177 = vsel %vm70, %v45, 0
    %v180 = vsel %vm70, %v46, 0
    %v183 = vsel %vm70, %v47, 0
    %v186 = vsel %vm70, %v48, 0
    %v189 = vsel %vm70, %v49, 0
    %191 = vmatprep.subr.mxu0 0.0
    %192 = vmatpush1.msra.mxu0 0.0
    %193 = vmatprep.subr.mxu0 0.0
    %194 = vmatpush1.msra.mxu0 0.0
    %195 = vmatprep.subr.mxu0 0.0
    %196 = vmatpush1.msra.mxu0 0.0
    %197 = vmatprep.subr.mxu0 0.0
    %198 = vmatpush1.msra.mxu0 0.0
    %199 = vmatprep.subr.mxu0 0.0
    %200 = vmatpush1.msra.mxu0 0.0
    %201 = vmatprep.subr.mxu0 0.0
    %202 = vmatpush1.msra.mxu0 0.0
    %203 = vmatprep.subr.mxu0 0.0
    %204 = vmatpush1.msra.mxu0 0.0
    %205 = vmatprep.subr.mxu0 0.0
    %206 = vmatpush1.msra.mxu0 0.0
    %207 = vmatprep.subr.mxu0 0.0
    %208 = vmatpush1.msra.mxu0 0.0
    %209 = vmatprep.subr.mxu0 0.0
    %210 = vmatpush1.msra.mxu0 0.0
    %211 = vmatprep.subr.mxu0 0.0
    %212 = vmatpush1.msra.mxu0 0.0
    %213 = vmatprep.subr.mxu0 0.0
    %214 = vmatpush1.msra.mxu0 0.0
    %215 = vmatprep.subr.mxu0 %v154
    %216 = vmatpush1.msra.mxu0 %v153
    %217 = vmatprep.subr.mxu0 %v152
    %218 = vmatpush1.msra.mxu0 %v151
    %219 = vmatprep.subr.mxu0 %v150
    %220 = vmatpush1.msra.mxu0 %v149
    %221 = vmatprep.subr.mxu0 %v148
    %222 = vmatpush1.msra.mxu0 %v147
    %223 = vmatprep.subr.mxu0 0.0
    %224 = vmatpush2.msra.mxu0 0.0
    %225 = vmatprep.subr.mxu0 0.0
    %226 = vmatpush2.msra.mxu0 0.0
    %227 = vmatprep.subr.mxu0 0.0
    %228 = vmatpush2.msra.mxu0 0.0
    %229 = vmatprep.subr.mxu0 0.0
    %230 = vmatpush2.msra.mxu0 0.0
    %231 = vmatprep.subr.mxu0 0.0
    %232 = vmatpush2.msra.mxu0 0.0
    %233 = vmatprep.subr.mxu0 0.0
    %234 = vmatpush2.msra.mxu0 0.0
    %235 = vmatprep.subr.mxu0 0.0
    %236 = vmatpush2.msra.mxu0 0.0
    %237 = vmatprep.subr.mxu0 0.0
    %238 = vmatpush2.msra.mxu0 0.0
    %239 = vmatprep.subr.mxu0 0.0
    %240 = vmatpush2.msra.mxu0 0.0
    %241 = vmatprep.subr.mxu0 0.0
    %242 = vmatpush2.msra.mxu0 0.0
    %243 = vmatprep.subr.mxu0 0.0
    %244 = vmatpush2.msra.mxu0 0.0
    %245 = vmatprep.subr.mxu0 0.0
    %246 = vmatpush2.msra.mxu0 0.0
    %247 = vmatprep.subr.mxu0 0.0
    %248 = vmatpush2.msra.mxu0 0.0
    %249 = vmatprep.subr.mxu0 0.0
    %250 = vmatpush2.msra.mxu0 0.0
    %251 = vmatprep.subr.mxu0 0.0
    %252 = vmatpush2.msra.mxu0 0.0
    %253 = vmatprep.subr.mxu0 0.0
    %254 = vmatpush2.msra.mxu0 0.0
    %255 = vmatprep.mubr.f32.mxu0 0.0
    %256 = vmatmul.mubr.f32.gmra.mxu0 %v168
    %v257 = vpop.f32.mrf.mxu0
    %v258 = vadd.f32 %v160, %v257
    %v259 = vpop.f32.mrf.mxu0
    %v260 = vadd.f32 %v164, %v259
    %261 = vmatprep.mubr.f32.mxu0 0.0
    %262 = vmatmul.mubr.f32.gmra.mxu0 %v171
    %v263 = vpop.f32.mrf.mxu0
    %v264 = vadd.f32 %v160, %v263
    %v265 = vpop.f32.mrf.mxu0
    %v266 = vadd.f32 %v164, %v265
    %267 = vmatprep.mubr.f32.mxu0 0.0
    %268 = vmatmul.mubr.f32.gmra.mxu0 %v174
    %v269 = vpop.f32.mrf.mxu0
    %v270 = vadd.f32 %v160, %v269
    %v271 = vpop.f32.mrf.mxu0
    %v272 = vadd.f32 %v164, %v271
    %273 = vmatprep.mubr.f32.mxu0 0.0
    %274 = vmatmul.mubr.f32.gmra.mxu0 %v177
    %v275 = vpop.f32.mrf.mxu0
    %v276 = vadd.f32 %v160, %v275
    %v277 = vpop.f32.mrf.mxu0
    %v278 = vadd.f32 %v164, %v277
    %279 = vmatprep.mubr.f32.mxu0 0.0
    %280 = vmatmul.mubr.f32.gmra.mxu0 %v180
    %v281 = vpop.f32.mrf.mxu0
    %v282 = vadd.f32 %v160, %v281
    %v283 = vpop.f32.mrf.mxu0
    %v284 = vadd.f32 %v164, %v283
    %285 = vmatprep.mubr.f32.mxu0 0.0
    %286 = vmatmul.mubr.f32.gmra.mxu0 %v183
    %v287 = vpop.f32.mrf.mxu0
    %v288 = vadd.f32 %v160, %v287
    %v289 = vpop.f32.mrf.mxu0
    %v290 = vadd.f32 %v164, %v289
    %291 = vmatprep.mubr.f32.mxu0 0.0
    %292 = vmatmul.mubr.f32.gmra.mxu0 %v186
    %v293 = vpop.f32.mrf.mxu0
    %v294 = vadd.f32 %v160, %v293
    %v295 = vpop.f32.mrf.mxu0
    %v296 = vadd.f32 %v164, %v295
    %297 = vmatprep.mubr.f32.mxu0 0.0
    %298 = vmatmul.mubr.f32.gmra.mxu0 %v189
    %v299 = vpop.f32.mrf.mxu0
    %v300 = vadd.f32 %v160, %v299
    %v301 = vpop.f32.mrf.mxu0
    %v302 = vadd.f32 %v164, %v301
    %303 = vdwg.mxu0
    %v304 = vmax.f32 %v258, 0.0
    %v305 = vmax.f32 %v260, 0.0
    %v306 = vmax.f32 %v264, 0.0
    %v307 = vmax.f32 %v266, 0.0
    %v308 = vmax.f32 %v270, 0.0
    %v309 = vmax.f32 %v272, 0.0
    %v310 = vmax.f32 %v276, 0.0
    %v311 = vmax.f32 %v278, 0.0
    %v312 = vmax.f32 %v282, 0.0
    %v313 = vmax.f32 %v284, 0.0
    %v314 = vmax.f32 %v288, 0.0
    %v315 = vmax.f32 %v290, 0.0
    %v316 = vmax.f32 %v294, 0.0
    %v317 = vmax.f32 %v296, 0.0
    %v318 = vmax.f32 %v300, 0.0
    %v319 = vmax.f32 %v302, 0.0
    %320 = vmatprep.subr.mxu0 0.0
    %321 = vmatpush1.xpose.msra.mxu0 0.0
    %322 = vmatprep.subr.mxu0 0.0
    %323 = vmatpush1.xpose.msra.mxu0 0.0
    %324 = vmatprep.subr.mxu0 0.0
    %325 = vmatpush1.xpose.msra.mxu0 0.0
    %326 = vmatprep.subr.mxu0 0.0
    %327 = vmatpush1.xpose.msra.mxu0 0.0
    %328 = vmatprep.subr.mxu0 0.0
    %329 = vmatpush1.xpose.msra.mxu0 0.0
    %330 = vmatprep.subr.mxu0 0.0
    %331 = vmatpush1.xpose.msra.mxu0 0.0
    %332 = vmatprep.subr.mxu0 0.0
    %333 = vmatpush1.xpose.msra.mxu0 0.0
    %334 = vmatprep.subr.mxu0 0.0
    %335 = vmatpush1.xpose.msra.mxu0 0.0
    %336 = vmatprep.subr.mxu0 %v319
    %337 = vmatpush1.xpose.msra.mxu0 %v318
    %338 = vmatprep.subr.mxu0 %v317
    %339 = vmatpush1.xpose.msra.mxu0 %v316
    %340 = vmatprep.subr.mxu0 %v315
    %341 = vmatpush1.xpose.msra.mxu0 %v314
    %342 = vmatprep.subr.mxu0 %v313
    %343 = vmatpush1.xpose.msra.mxu0 %v312
    %344 = vmatprep.subr.mxu0 %v311
    %345 = vmatpush1.xpose.msra.mxu0 %v310
    %346 = vmatprep.subr.mxu0 %v309
    %347 = vmatpush1.xpose.msra.mxu0 %v308
    %348 = vmatprep.subr.mxu0 %v307
    %349 = vmatpush1.xpose.msra.mxu0 %v306
    %350 = vmatprep.subr.mxu0 %v305
    %351 = vmatpush1.xpose.msra.mxu0 %v304
    %352 = vmatprep.subr.mxu0 0.0
    %353 = vmatpush2.xpose.msra.mxu0 0.0
    %354 = vmatprep.subr.mxu0 0.0
    %355 = vmatpush2.xpose.msra.mxu0 0.0
    %356 = vmatprep.subr.mxu0 0.0
    %357 = vmatpush2.xpose.msra.mxu0 0.0
    %358 = vmatprep.subr.mxu0 0.0
    %359 = vmatpush2.xpose.msra.mxu0 0.0
    %360 = vmatprep.subr.mxu0 0.0
    %361 = vmatpush2.xpose.msra.mxu0 0.0
    %362 = vmatprep.subr.mxu0 0.0
    %363 = vmatpush2.xpose.msra.mxu0 0.0
    %364 = vmatprep.subr.mxu0 0.0
    %365 = vmatpush2.xpose.msra.mxu0 0.0
    %366 = vmatprep.subr.mxu0 0.0
    %367 = vmatpush2.xpose.msra.mxu0 0.0
    %368 = vmatprep.subr.mxu0 0.0
    %369 = vmatpush2.xpose.msra.mxu0 0.0
    %370 = vmatprep.subr.mxu0 0.0
    %371 = vmatpush2.xpose.msra.mxu0 0.0
    %372 = vmatprep.subr.mxu0 0.0
    %373 = vmatpush2.xpose.msra.mxu0 0.0
    %374 = vmatprep.subr.mxu0 0.0
    %375 = vmatpush2.xpose.msra.mxu0 0.0
    %376 = vmatprep.subr.mxu0 0.0
    %377 = vmatpush2.xpose.msra.mxu0 0.0
    %378 = vmatprep.subr.mxu0 0.0
    %379 = vmatpush2.xpose.msra.mxu0 0.0
    %380 = vmatprep.subr.mxu0 0.0
    %381 = vmatpush2.xpose.msra.mxu0 0.0
    %382 = vmatprep.subr.mxu0 0.0
    %383 = vmatpush2.xpose.msra.mxu0 0.0
    %384 = vmatprep.mubr.f32.mxu0 %v146
    %385 = vmatmul.mubr.f32.gmra.mxu0 %v145
    %v386 = vpop.f32.mrf.mxu0
    %v387 = vadd.f32 0.0, %v386
    %v388 = vpop.f32.mrf.mxu0
    %389 = vdwg.mxu0
    %v390 = vlaneseq
    %v391 = vshrl.u32 %v390, 7
    %v392 = vlaneseq
    %v393 = vand.u32 %v392, 127
    %v394 = vmul.u32 %v391, 8
    %v395 = vsub.s32 %v393, %v394
    %vm396 = vcmp.ge.s32.totalorder %v395, 0
    %vm397 = vcmp.lt.s32.totalorder %v395, 8
    %vm398 = vmand %vm396, %vm397
    %v399 = vsel %vm398, %v387, -1e+30
    %vm400 = vcmask 523264
    %v401 = vsel %vm400, %v399, -inf
    %402 = vmax.xlane.f32.xlu0 %v401
    %v403 = vpop.xlane.xlu0 %402
    %v404 = vsub.f32 %v399, %v403
    %v405 = vmul.f32 %v404, 1.442695
    %v406 = vpow.pop %v405
    %v407 = vsel %vm398, %v406, 0.0
    %v408 = vsel %vm400, %v407, 0.0
    %409 = vadd.xlane.f32.xlu0 %v408
    %v410 = vpop.xlane.xlu0 %409
    %v411 = vrcp.pop %v410
    %v412 = vmul.f32 %v407, %v411
    %v414 = vsel %vm400, %v412, 0
    %416 = vmatprep.subr.mxu0 0.0
    %417 = vmatpush1.msra.mxu0 0.0
    %418 = vmatprep.subr.mxu0 0.0
    %419 = vmatpush1.msra.mxu0 0.0
    %420 = vmatprep.subr.mxu0 0.0
    %421 = vmatpush1.msra.mxu0 0.0
    %422 = vmatprep.subr.mxu0 0.0
    %423 = vmatpush1.msra.mxu0 0.0
    %424 = vmatprep.subr.mxu0 0.0
    %425 = vmatpush1.msra.mxu0 0.0
    %426 = vmatprep.subr.mxu0 0.0
    %427 = vmatpush1.msra.mxu0 0.0
    %428 = vmatprep.subr.mxu0 0.0
    %429 = vmatpush1.msra.mxu0 0.0
    %430 = vmatprep.subr.mxu0 0.0
    %431 = vmatpush1.msra.mxu0 0.0
    %432 = vmatprep.subr.mxu0 0.0
    %433 = vmatpush1.msra.mxu0 %v49
    %434 = vmatprep.subr.mxu0 0.0
    %435 = vmatpush1.msra.mxu0 %v48
    %436 = vmatprep.subr.mxu0 0.0
    %437 = vmatpush1.msra.mxu0 %v47
    %438 = vmatprep.subr.mxu0 0.0
    %439 = vmatpush1.msra.mxu0 %v46
    %440 = vmatprep.subr.mxu0 0.0
    %441 = vmatpush1.msra.mxu0 %v45
    %442 = vmatprep.subr.mxu0 0.0
    %443 = vmatpush1.msra.mxu0 %v44
    %444 = vmatprep.subr.mxu0 0.0
    %445 = vmatpush1.msra.mxu0 %v43
    %446 = vmatprep.subr.mxu0 0.0
    %447 = vmatpush1.msra.mxu0 %v42
    %448 = vmatprep.subr.mxu0 0.0
    %449 = vmatpush2.msra.mxu0 0.0
    %450 = vmatprep.subr.mxu0 0.0
    %451 = vmatpush2.msra.mxu0 0.0
    %452 = vmatprep.subr.mxu0 0.0
    %453 = vmatpush2.msra.mxu0 0.0
    %454 = vmatprep.subr.mxu0 0.0
    %455 = vmatpush2.msra.mxu0 0.0
    %456 = vmatprep.subr.mxu0 0.0
    %457 = vmatpush2.msra.mxu0 0.0
    %458 = vmatprep.subr.mxu0 0.0
    %459 = vmatpush2.msra.mxu0 0.0
    %460 = vmatprep.subr.mxu0 0.0
    %461 = vmatpush2.msra.mxu0 0.0
    %462 = vmatprep.subr.mxu0 0.0
    %463 = vmatpush2.msra.mxu0 0.0
    %464 = vmatprep.subr.mxu0 0.0
    %465 = vmatpush2.msra.mxu0 0.0
    %466 = vmatprep.subr.mxu0 0.0
    %467 = vmatpush2.msra.mxu0 0.0
    %468 = vmatprep.subr.mxu0 0.0
    %469 = vmatpush2.msra.mxu0 0.0
    %470 = vmatprep.subr.mxu0 0.0
    %471 = vmatpush2.msra.mxu0 0.0
    %472 = vmatprep.subr.mxu0 0.0
    %473 = vmatpush2.msra.mxu0 0.0
    %474 = vmatprep.subr.mxu0 0.0
    %475 = vmatpush2.msra.mxu0 0.0
    %476 = vmatprep.subr.mxu0 0.0
    %477 = vmatpush2.msra.mxu0 0.0
    %478 = vmatprep.subr.mxu0 0.0
    %479 = vmatpush2.msra.mxu0 0.0
    %480 = vmatprep.mubr.f32.mxu0 0.0
    %481 = vmatmul.mubr.f32.gmra.mxu0 %v414
    %v482 = vpop.f32.mrf.mxu0
    %v483 = vadd.f32 0.0, %v482
    %v484 = vpop.f32.mrf.mxu0
    %485 = vdwg.mxu0
    %486 = vst.msk [vmem:[#allocation6] sm:$0xff] %vm70, %v483
    %487 = vrot.lane.b32.xlu0 %v412, 120
    %v488 = vpop.permute.xlu0 %487
    %v490 = vadd.f32 %v412, %v488
    %491 = vrot.lane.b32.xlu0 %v412, 112
    %v492 = vpop.permute.xlu0 %491
    %v494 = vadd.f32 %v490, %v492
    %495 = vrot.lane.b32.xlu0 %v412, 104
    %v496 = vpop.permute.xlu0 %495
    %v498 = vadd.f32 %v494, %v496
    %499 = vrot.lane.b32.xlu0 %v412, 96
    %v500 = vpop.permute.xlu0 %499
    %v502 = vadd.f32 %v498, %v500
    %503 = vrot.lane.b32.xlu0 %v412, 88
    %v504 = vpop.permute.xlu0 %503
    %v506 = vadd.f32 %v502, %v504
    %507 = vrot.lane.b32.xlu0 %v412, 80
    %v508 = vpop.permute.xlu0 %507
    %v510 = vadd.f32 %v506, %v508
    %511 = vrot.lane.b32.xlu0 %v412, 72
    %v512 = vpop.permute.xlu0 %511
    %v514 = vadd.f32 %v510, %v512
    %vm515 = vcmask 64512
    %516 = vst.msk [vmem:[#allocation5] sm:$0xff] %vm515, %v514
    // Predicated region
    $region30: #{tpu_custom_call.1} parent=1 // pred_check
      _
    $region31: #{tpu_custom_call.1} parent=1 // pred_check_branch
      %518 = sbr.rel (0) target = $region33
    $region32: #{tpu_custom_call.1} parent=1 // pred_region
      %s520 = ssub.s32 128, 128
      %521 = vsyncadd [#allocation4], %s520
      %s523 = sshll.u32 [#allocation5], 4
      %s524 = int_to_ptr.vmem [resolvable:$true] %s523
      %526 = dma.vmem_to_hbm [thread:$0]  %s524, 128, %s6, [#allocation4]
    $region33: #{tpu_custom_call.1} parent=1 // pred_fallthru
      _
    // Predicated region
    $region34: #{tpu_custom_call.1} parent=1 // pred_check
      _
    $region35: #{tpu_custom_call.1} parent=1 // pred_check_branch
      %528 = sbr.rel (0) target = $region37
    $region36: #{tpu_custom_call.1} parent=1 // pred_region
      %s530 = ssub.s32 128, 128
      %531 = vsyncadd [#allocation7], %s530
      %s533 = sshll.u32 [#allocation6], 4
      %s534 = int_to_ptr.vmem [resolvable:$true] %s533
      %536 = dma.vmem_to_hbm [thread:$0]  %s534, 128, %s7, [#allocation7]
    $region37: #{tpu_custom_call.1} parent=1 // pred_fallthru
      _
    // Predicated region
    $region38: #{tpu_custom_call.1} parent=1 // pred_check
      _
    $region39: #{tpu_custom_call.1} parent=1 // pred_check_branch
      %538 = sbr.rel (0) target = $region41
    $region40: #{tpu_custom_call.1} parent=1 // pred_region
      %539 = dma.done [#allocation4], 128
    $region41: #{tpu_custom_call.1} parent=1 // pred_fallthru
      _
    // Predicated region
    $region42: #{tpu_custom_call.1} parent=1 // pred_check
      _
    $region43: #{tpu_custom_call.1} parent=1 // pred_check_branch
      %541 = sbr.rel (0) target = $region45
    $region44: #{tpu_custom_call.1} parent=1 // pred_region
      %542 = dma.done [#allocation7], 128
    $region45: #{tpu_custom_call.1} parent=1 // pred_fallthru
      _
    %543 = vsyncpa [#allocation3], 1
    %544 = vsyncpa [#allocation4], 1
    %545 = vsyncpa [#allocation7], 1

</llo_original>
